<compile_context>
chip_gen: v5e
topology: v5e:2x2
jax: 0.10.0
libtpu: 0.0.40
codegen_flags: <defaults>
</compile_context>

<pallas_src>
import functools

import jax
import jax.numpy as jnp
from jax.experimental import pallas as pl
from jax.experimental.pallas import tpu as pltpu

hidden_features = 128
num_hidden = 5
BN_EPS = 1e-5
LANE = 128


def _round_up(x, m):
    return (x + m - 1) // m * m


def _fused_mlp_kernel(x_ref, w_ref, bnb_ref, o_ref):
    """x_ref: (N, 128) f32 (zero-padded lanes)
    w_ref: (L+1, 128, 128) bf16  -- L hidden-layer weights + head weight, pre-transposed
    bnb_ref: (2L+1, 128) f32     -- rows [0..L): gamma, [L..2L): beta, [2L]: head bias
    o_ref: (N, 128) f32          -- lane-dense padded head output
    """
    n_layers = w_ref.shape[0] - 1                                    # 6 BN layers
    h = x_ref[...]                                                   # (N, 128) f32

    for i in range(n_layers):                                        # statically unrolled
        w = w_ref[i]                                                 # (128, 128) bf16
        z = jnp.dot(h.astype(jnp.bfloat16), w,
                    preferred_element_type=jnp.float32)              # (N, 128) f32
        d = z.shape[-1]
        # BatchNorm1d (training-mode batch stats, biased variance), folded into a single
        # per-feature scale/shift. One fused XLU reduction for mean and mean-of-squares.
        stats = jnp.mean(jnp.concatenate([z, z * z], axis=-1),
                         axis=0, keepdims=True)                      # (1, 256)
        mean = stats[:, :d]
        mean_sq = stats[:, d:]
        var = jnp.maximum(mean_sq - mean * mean, 0.0)                # clamp cancellation
        gamma = bnb_ref[i:i + 1, :]                                  # (1, 128)
        beta = bnb_ref[n_layers + i:n_layers + i + 1, :]             # (1, 128)
        scale = gamma * jax.lax.rsqrt(var + BN_EPS)                  # rsqrt -> EUP slot
        shift = beta - mean * scale
        h = jnp.maximum(z * scale + shift, 0.0)                      # ReLU

    # Head: Linear with bias; output is a lane-dense 128-wide padded tile.
    bias = bnb_ref[2 * n_layers:2 * n_layers + 1, :]
    o_ref[...] = (
        jnp.dot(h.astype(jnp.bfloat16), w_ref[n_layers],
                preferred_element_type=jnp.float32)
        + bias
    )


@functools.partial(jax.jit, static_argnames=("out_features",))
def mlp_forward(x, w_stack, bnb, *, out_features):
    n, din = x.shape
    hidden = w_stack.shape[-1]
    # Zero-pad x to a lane-dense (N, 128) tile; the padded lanes hit zero-padded weight
    # rows, so the result is numerically identical.
    x_pad = jnp.pad(x, ((0, 0), (0, hidden - din)))

    out = pl.pallas_call(
        _fused_mlp_kernel,
        out_shape=jax.ShapeDtypeStruct((n, hidden), jnp.float32),
        in_specs=[pl.BlockSpec(memory_space=pltpu.VMEM)] * 3,
        out_specs=pl.BlockSpec(memory_space=pltpu.VMEM),
    )(x_pad, w_stack, bnb)
    return out[:, :out_features]


def init_params(key, in_features, hidden, out_features, n_hidden):
    """Matches the PyTorch module's init: kaiming_normal_ (fan_in, gain=sqrt(2)) on Linear
    weights, zero bias, BatchNorm gamma=1 / beta=0. Weights are stored pre-transposed as
    (Din, Dout), zero-padded to (128, 128), stacked into one bf16 array; gamma/beta/bias
    are packed into a single f32 array so the kernel prologue issues 3 DMAs total."""
    n_layers = n_hidden + 1                                          # 6 BN layers
    out_pad = _round_up(out_features, LANE)
    assert out_pad == hidden, "weight stacking assumes the head fits one 128-lane tile"

    dims = [in_features] + [hidden] * n_layers
    w_list = []
    for i in range(n_layers):
        din = dims[i]
        key, sub = jax.random.split(key)
        std = (2.0 / din) ** 0.5
        w = std * jax.random.normal(sub, (din, hidden), dtype=jnp.float32)
        w = jnp.pad(w, ((0, hidden - din), (0, 0)))                  # pad rows to 128
        w_list.append(w.astype(jnp.bfloat16))

    # Final Linear(hidden, out_features, bias=True), zero-padded to a lane-dense width.
    key, sub = jax.random.split(key)
    std = (2.0 / hidden) ** 0.5
    w_out = std * jax.random.normal(sub, (hidden, out_features), dtype=jnp.float32)
    w_out = jnp.pad(w_out, ((0, 0), (0, out_pad - out_features))).astype(jnp.bfloat16)
    w_list.append(w_out)
    w_stack = jnp.stack(w_list)                                      # (7, 128, 128) bf16

    gammas = jnp.ones((n_layers, hidden), dtype=jnp.float32)
    betas = jnp.zeros((n_layers, hidden), dtype=jnp.float32)
    bias = jnp.zeros((1, out_pad), dtype=jnp.float32)
    bnb = jnp.concatenate([gammas, betas, bias], axis=0)             # (13, 128) f32
    return w_stack, bnb


def mlp_reference(x, w_stack, bnb, out_features):
    """Pure-JAX reference with the same dtypes (bf16 matmul inputs, f32 accum/BN math),
    using the torch-faithful two-pass variance E[(z-mean)^2]."""
    n_layers = w_stack.shape[0] - 1
    hidden = w_stack.shape[-1]
    h = jnp.pad(x, ((0, 0), (0, hidden - x.shape[1])))
    for i in range(n_layers):
        z = jnp.dot(h.astype(jnp.bfloat16), w_stack[i],
                    preferred_element_type=jnp.float32)
        mean = jnp.mean(z, axis=0, keepdims=True)
        var = jnp.mean((z - mean) ** 2, axis=0, keepdims=True)
        gamma = bnb[i:i + 1]
        beta = bnb[n_layers + i:n_layers + i + 1]
        h = jnp.maximum((z - mean) * jax.lax.rsqrt(var + BN_EPS) * gamma + beta, 0.0)
    out = (jnp.dot(h.astype(jnp.bfloat16), w_stack[n_layers],
                   preferred_element_type=jnp.float32)
           + bnb[2 * n_layers:2 * n_layers + 1])
    return out[:, :out_features]


if __name__ == "__main__":
    batch = 8
    in_features = 32
    out_features = 16

    key = jax.random.PRNGKey(0)
    key, xkey = jax.random.split(key)
    x = jax.random.normal(xkey, (batch, in_features), dtype=jnp.float32)

    w_stack, bnb = init_params(key, in_features, hidden_features, out_features, num_hidden)

    out = mlp_forward(x, w_stack, bnb, out_features=out_features)
    jax.block_until_ready(out)

    assert out.shape == (batch, out_features), out.shape
    assert out.dtype == jnp.float32
    assert bool(jnp.all(jnp.isfinite(out)))

    ref = mlp_reference(x, w_stack, bnb, out_features)
    max_err = float(jnp.max(jnp.abs(out - ref)))
    assert jnp.allclose(out, ref, rtol=2e-2, atol=2e-2), max_err

    print("KERNEL_OK")
</pallas_src>

<mosaic_0001>
module attributes {stable_mosaic.version = 11 : i64} {
  func.func @_fused_mlp_kernel(%arg0: memref<8x128xf32, #tpu.memory_space<vmem>>, %arg1: memref<7x128x128xbf16, #tpu.memory_space<vmem>>, %arg2: memref<13x128xf32, #tpu.memory_space<vmem>>, %arg3: memref<8x128xf32, #tpu.memory_space<vmem>>) attributes {dimension_semantics = [], scalar_prefetch = 0 : i64, scratch_operands = 0 : i64, tpu.core_type = #tpu.core_type<tc>} {
    %c0 = arith.constant 0 : index
    %c0_0 = arith.constant 0 : index
    %0 = vector.load %arg0[%c0, %c0_0] : memref<8x128xf32, #tpu.memory_space<vmem>>, vector<8x128xf32>
    %c0_1 = arith.constant 0 : index
    %c0_2 = arith.constant 0 : index
    %c0_3 = arith.constant 0 : index
    %1 = vector.load %arg1[%c0_1, %c0_2, %c0_3] : memref<7x128x128xbf16, #tpu.memory_space<vmem>>, vector<1x128x128xbf16>
    %2 = vector.shape_cast %1 : vector<1x128x128xbf16> to vector<128x128xbf16>
    %3 = arith.truncf %0 : vector<8x128xf32> to vector<8x128xbf16>
    %cst = arith.constant dense<0.000000e+00> : vector<8x128xf32>
    %4 = tpu.matmul %3, %2, %cst {dimension_numbers = #tpu.dot_dimension_numbers<[1], [0], [0], [1], [0, 0, 1, 1], [], []>} : vector<8x128xbf16>, vector<128x128xbf16>, vector<8x128xf32> -> vector<8x128xf32>
    %5 = arith.mulf %4, %4 : vector<8x128xf32>
    %6 = tpu.concatenate %4, %5 in 1 : vector<8x128xf32>, vector<8x128xf32> -> vector<8x256xf32>
    %cst_4 = arith.constant dense<0.000000e+00> : vector<256xf32>
    %7 = vector.multi_reduction <add>, %6, %cst_4 [0] : vector<8x256xf32> to vector<256xf32>
    %8 = vector.shape_cast %7 : vector<256xf32> to vector<1x256xf32>
    %cst_5 = arith.constant 8.000000e+00 : f32
    %9 = vector.broadcast %cst_5 : f32 to vector<1x256xf32>
    %10 = arith.divf %8, %9 : vector<1x256xf32>
    %11 = vector.extract_strided_slice %10 {offsets = [0, 0], sizes = [1, 128], strides = [1, 1]} : vector<1x256xf32> to vector<1x128xf32>
    %12 = vector.extract_strided_slice %10 {offsets = [0, 128], sizes = [1, 128], strides = [1, 1]} : vector<1x256xf32> to vector<1x128xf32>
    %13 = arith.mulf %11, %11 : vector<1x128xf32>
    %14 = arith.subf %12, %13 : vector<1x128xf32>
    %cst_6 = arith.constant 0.000000e+00 : f32
    %15 = vector.broadcast %cst_6 : f32 to vector<1x128xf32>
    %16 = arith.maximumf %14, %15 : vector<1x128xf32>
    %c0_7 = arith.constant 0 : index
    %c0_8 = arith.constant 0 : index
    %17 = vector.load %arg2[%c0_7, %c0_8] : memref<13x128xf32, #tpu.memory_space<vmem>>, vector<1x128xf32>
    %c6 = arith.constant 6 : index
    %c0_9 = arith.constant 0 : index
    %18 = vector.load %arg2[%c6, %c0_9] : memref<13x128xf32, #tpu.memory_space<vmem>>, vector<1x128xf32>
    %cst_10 = arith.constant 9.99999974E-6 : f32
    %19 = vector.broadcast %cst_10 : f32 to vector<1x128xf32>
    %20 = arith.addf %16, %19 : vector<1x128xf32>
    %21 = math.rsqrt %20 : vector<1x128xf32>
    %22 = arith.mulf %17, %21 : vector<1x128xf32>
    %23 = arith.mulf %11, %22 : vector<1x128xf32>
    %24 = arith.subf %18, %23 : vector<1x128xf32>
    %25 = vector.broadcast %22 : vector<1x128xf32> to vector<8x128xf32>
    %26 = arith.mulf %4, %25 : vector<8x128xf32>
    %27 = vector.broadcast %24 : vector<1x128xf32> to vector<8x128xf32>
    %28 = arith.addf %26, %27 : vector<8x128xf32>
    %cst_11 = arith.constant 0.000000e+00 : f32
    %29 = vector.broadcast %cst_11 : f32 to vector<8x128xf32>
    %30 = arith.maximumf %28, %29 : vector<8x128xf32>
    %c1 = arith.constant 1 : index
    %c0_12 = arith.constant 0 : index
    %c0_13 = arith.constant 0 : index
    %31 = vector.load %arg1[%c1, %c0_12, %c0_13] : memref<7x128x128xbf16, #tpu.memory_space<vmem>>, vector<1x128x128xbf16>
    %32 = vector.shape_cast %31 : vector<1x128x128xbf16> to vector<128x128xbf16>
    %33 = arith.truncf %30 : vector<8x128xf32> to vector<8x128xbf16>
    %cst_14 = arith.constant dense<0.000000e+00> : vector<8x128xf32>
    %34 = tpu.matmul %33, %32, %cst_14 {dimension_numbers = #tpu.dot_dimension_numbers<[1], [0], [0], [1], [0, 0, 1, 1], [], []>} : vector<8x128xbf16>, vector<128x128xbf16>, vector<8x128xf32> -> vector<8x128xf32>
    %35 = arith.mulf %34, %34 : vector<8x128xf32>
    %36 = tpu.concatenate %34, %35 in 1 : vector<8x128xf32>, vector<8x128xf32> -> vector<8x256xf32>
    %cst_15 = arith.constant dense<0.000000e+00> : vector<256xf32>
    %37 = vector.multi_reduction <add>, %36, %cst_15 [0] : vector<8x256xf32> to vector<256xf32>
    %38 = vector.shape_cast %37 : vector<256xf32> to vector<1x256xf32>
    %cst_16 = arith.constant 8.000000e+00 : f32
    %39 = vector.broadcast %cst_16 : f32 to vector<1x256xf32>
    %40 = arith.divf %38, %39 : vector<1x256xf32>
    %41 = vector.extract_strided_slice %40 {offsets = [0, 0], sizes = [1, 128], strides = [1, 1]} : vector<1x256xf32> to vector<1x128xf32>
    %42 = vector.extract_strided_slice %40 {offsets = [0, 128], sizes = [1, 128], strides = [1, 1]} : vector<1x256xf32> to vector<1x128xf32>
    %43 = arith.mulf %41, %41 : vector<1x128xf32>
    %44 = arith.subf %42, %43 : vector<1x128xf32>
    %cst_17 = arith.constant 0.000000e+00 : f32
    %45 = vector.broadcast %cst_17 : f32 to vector<1x128xf32>
    %46 = arith.maximumf %44, %45 : vector<1x128xf32>
    %c1_18 = arith.constant 1 : index
    %c0_19 = arith.constant 0 : index
    %47 = vector.load %arg2[%c1_18, %c0_19] : memref<13x128xf32, #tpu.memory_space<vmem>>, vector<1x128xf32>
    %c7 = arith.constant 7 : index
    %c0_20 = arith.constant 0 : index
    %48 = vector.load %arg2[%c7, %c0_20] : memref<13x128xf32, #tpu.memory_space<vmem>>, vector<1x128xf32>
    %cst_21 = arith.constant 9.99999974E-6 : f32
    %49 = vector.broadcast %cst_21 : f32 to vector<1x128xf32>
    %50 = arith.addf %46, %49 : vector<1x128xf32>
    %51 = math.rsqrt %50 : vector<1x128xf32>
    %52 = arith.mulf %47, %51 : vector<1x128xf32>
    %53 = arith.mulf %41, %52 : vector<1x128xf32>
    %54 = arith.subf %48, %53 : vector<1x128xf32>
    %55 = vector.broadcast %52 : vector<1x128xf32> to vector<8x128xf32>
    %56 = arith.mulf %34, %55 : vector<8x128xf32>
    %57 = vector.broadcast %54 : vector<1x128xf32> to vector<8x128xf32>
    %58 = arith.addf %56, %57 : vector<8x128xf32>
    %cst_22 = arith.constant 0.000000e+00 : f32
    %59 = vector.broadcast %cst_22 : f32 to vector<8x128xf32>
    %60 = arith.maximumf %58, %59 : vector<8x128xf32>
    %c2 = arith.constant 2 : index
    %c0_23 = arith.constant 0 : index
    %c0_24 = arith.constant 0 : index
    %61 = vector.load %arg1[%c2, %c0_23, %c0_24] : memref<7x128x128xbf16, #tpu.memory_space<vmem>>, vector<1x128x128xbf16>
    %62 = vector.shape_cast %61 : vector<1x128x128xbf16> to vector<128x128xbf16>
    %63 = arith.truncf %60 : vector<8x128xf32> to vector<8x128xbf16>
    %cst_25 = arith.constant dense<0.000000e+00> : vector<8x128xf32>
    %64 = tpu.matmul %63, %62, %cst_25 {dimension_numbers = #tpu.dot_dimension_numbers<[1], [0], [0], [1], [0, 0, 1, 1], [], []>} : vector<8x128xbf16>, vector<128x128xbf16>, vector<8x128xf32> -> vector<8x128xf32>
    %65 = arith.mulf %64, %64 : vector<8x128xf32>
    %66 = tpu.concatenate %64, %65 in 1 : vector<8x128xf32>, vector<8x128xf32> -> vector<8x256xf32>
    %cst_26 = arith.constant dense<0.000000e+00> : vector<256xf32>
    %67 = vector.multi_reduction <add>, %66, %cst_26 [0] : vector<8x256xf32> to vector<256xf32>
    %68 = vector.shape_cast %67 : vector<256xf32> to vector<1x256xf32>
    %cst_27 = arith.constant 8.000000e+00 : f32
    %69 = vector.broadcast %cst_27 : f32 to vector<1x256xf32>
    %70 = arith.divf %68, %69 : vector<1x256xf32>
    %71 = vector.extract_strided_slice %70 {offsets = [0, 0], sizes = [1, 128], strides = [1, 1]} : vector<1x256xf32> to vector<1x128xf32>
    %72 = vector.extract_strided_slice %70 {offsets = [0, 128], sizes = [1, 128], strides = [1, 1]} : vector<1x256xf32> to vector<1x128xf32>
    %73 = arith.mulf %71, %71 : vector<1x128xf32>
    %74 = arith.subf %72, %73 : vector<1x128xf32>
    %cst_28 = arith.constant 0.000000e+00 : f32
    %75 = vector.broadcast %cst_28 : f32 to vector<1x128xf32>
    %76 = arith.maximumf %74, %75 : vector<1x128xf32>
    %c2_29 = arith.constant 2 : index
    %c0_30 = arith.constant 0 : index
    %77 = vector.load %arg2[%c2_29, %c0_30] : memref<13x128xf32, #tpu.memory_space<vmem>>, vector<1x128xf32>
    %c8 = arith.constant 8 : index
    %c0_31 = arith.constant 0 : index
    %78 = vector.load %arg2[%c8, %c0_31] : memref<13x128xf32, #tpu.memory_space<vmem>>, vector<1x128xf32>
    %cst_32 = arith.constant 9.99999974E-6 : f32
    %79 = vector.broadcast %cst_32 : f32 to vector<1x128xf32>
    %80 = arith.addf %76, %79 : vector<1x128xf32>
    %81 = math.rsqrt %80 : vector<1x128xf32>
    %82 = arith.mulf %77, %81 : vector<1x128xf32>
    %83 = arith.mulf %71, %82 : vector<1x128xf32>
    %84 = arith.subf %78, %83 : vector<1x128xf32>
    %85 = vector.broadcast %82 : vector<1x128xf32> to vector<8x128xf32>
    %86 = arith.mulf %64, %85 : vector<8x128xf32>
    %87 = vector.broadcast %84 : vector<1x128xf32> to vector<8x128xf32>
    %88 = arith.addf %86, %87 : vector<8x128xf32>
    %cst_33 = arith.constant 0.000000e+00 : f32
    %89 = vector.broadcast %cst_33 : f32 to vector<8x128xf32>
    %90 = arith.maximumf %88, %89 : vector<8x128xf32>
    %c3 = arith.constant 3 : index
    %c0_34 = arith.constant 0 : index
    %c0_35 = arith.constant 0 : index
    %91 = vector.load %arg1[%c3, %c0_34, %c0_35] : memref<7x128x128xbf16, #tpu.memory_space<vmem>>, vector<1x128x128xbf16>
    %92 = vector.shape_cast %91 : vector<1x128x128xbf16> to vector<128x128xbf16>
    %93 = arith.truncf %90 : vector<8x128xf32> to vector<8x128xbf16>
    %cst_36 = arith.constant dense<0.000000e+00> : vector<8x128xf32>
    %94 = tpu.matmul %93, %92, %cst_36 {dimension_numbers = #tpu.dot_dimension_numbers<[1], [0], [0], [1], [0, 0, 1, 1], [], []>} : vector<8x128xbf16>, vector<128x128xbf16>, vector<8x128xf32> -> vector<8x128xf32>
    %95 = arith.mulf %94, %94 : vector<8x128xf32>
    %96 = tpu.concatenate %94, %95 in 1 : vector<8x128xf32>, vector<8x128xf32> -> vector<8x256xf32>
    %cst_37 = arith.constant dense<0.000000e+00> : vector<256xf32>
    %97 = vector.multi_reduction <add>, %96, %cst_37 [0] : vector<8x256xf32> to vector<256xf32>
    %98 = vector.shape_cast %97 : vector<256xf32> to vector<1x256xf32>
    %cst_38 = arith.constant 8.000000e+00 : f32
    %99 = vector.broadcast %cst_38 : f32 to vector<1x256xf32>
    %100 = arith.divf %98, %99 : vector<1x256xf32>
    %101 = vector.extract_strided_slice %100 {offsets = [0, 0], sizes = [1, 128], strides = [1, 1]} : vector<1x256xf32> to vector<1x128xf32>
    %102 = vector.extract_strided_slice %100 {offsets = [0, 128], sizes = [1, 128], strides = [1, 1]} : vector<1x256xf32> to vector<1x128xf32>
    %103 = arith.mulf %101, %101 : vector<1x128xf32>
    %104 = arith.subf %102, %103 : vector<1x128xf32>
    %cst_39 = arith.constant 0.000000e+00 : f32
    %105 = vector.broadcast %cst_39 : f32 to vector<1x128xf32>
    %106 = arith.maximumf %104, %105 : vector<1x128xf32>
    %c3_40 = arith.constant 3 : index
    %c0_41 = arith.constant 0 : index
    %107 = vector.load %arg2[%c3_40, %c0_41] : memref<13x128xf32, #tpu.memory_space<vmem>>, vector<1x128xf32>
    %c9 = arith.constant 9 : index
    %c0_42 = arith.constant 0 : index
    %108 = vector.load %arg2[%c9, %c0_42] : memref<13x128xf32, #tpu.memory_space<vmem>>, vector<1x128xf32>
    %cst_43 = arith.constant 9.99999974E-6 : f32
    %109 = vector.broadcast %cst_43 : f32 to vector<1x128xf32>
    %110 = arith.addf %106, %109 : vector<1x128xf32>
    %111 = math.rsqrt %110 : vector<1x128xf32>
    %112 = arith.mulf %107, %111 : vector<1x128xf32>
    %113 = arith.mulf %101, %112 : vector<1x128xf32>
    %114 = arith.subf %108, %113 : vector<1x128xf32>
    %115 = vector.broadcast %112 : vector<1x128xf32> to vector<8x128xf32>
    %116 = arith.mulf %94, %115 : vector<8x128xf32>
    %117 = vector.broadcast %114 : vector<1x128xf32> to vector<8x128xf32>
    %118 = arith.addf %116, %117 : vector<8x128xf32>
    %cst_44 = arith.constant 0.000000e+00 : f32
    %119 = vector.broadcast %cst_44 : f32 to vector<8x128xf32>
    %120 = arith.maximumf %118, %119 : vector<8x128xf32>
    %c4 = arith.constant 4 : index
    %c0_45 = arith.constant 0 : index
    %c0_46 = arith.constant 0 : index
    %121 = vector.load %arg1[%c4, %c0_45, %c0_46] : memref<7x128x128xbf16, #tpu.memory_space<vmem>>, vector<1x128x128xbf16>
    %122 = vector.shape_cast %121 : vector<1x128x128xbf16> to vector<128x128xbf16>
    %123 = arith.truncf %120 : vector<8x128xf32> to vector<8x128xbf16>
    %cst_47 = arith.constant dense<0.000000e+00> : vector<8x128xf32>
    %124 = tpu.matmul %123, %122, %cst_47 {dimension_numbers = #tpu.dot_dimension_numbers<[1], [0], [0], [1], [0, 0, 1, 1], [], []>} : vector<8x128xbf16>, vector<128x128xbf16>, vector<8x128xf32> -> vector<8x128xf32>
    %125 = arith.mulf %124, %124 : vector<8x128xf32>
    %126 = tpu.concatenate %124, %125 in 1 : vector<8x128xf32>, vector<8x128xf32> -> vector<8x256xf32>
    %cst_48 = arith.constant dense<0.000000e+00> : vector<256xf32>
    %127 = vector.multi_reduction <add>, %126, %cst_48 [0] : vector<8x256xf32> to vector<256xf32>
    %128 = vector.shape_cast %127 : vector<256xf32> to vector<1x256xf32>
    %cst_49 = arith.constant 8.000000e+00 : f32
    %129 = vector.broadcast %cst_49 : f32 to vector<1x256xf32>
    %130 = arith.divf %128, %129 : vector<1x256xf32>
    %131 = vector.extract_strided_slice %130 {offsets = [0, 0], sizes = [1, 128], strides = [1, 1]} : vector<1x256xf32> to vector<1x128xf32>
    %132 = vector.extract_strided_slice %130 {offsets = [0, 128], sizes = [1, 128], strides = [1, 1]} : vector<1x256xf32> to vector<1x128xf32>
    %133 = arith.mulf %131, %131 : vector<1x128xf32>
    %134 = arith.subf %132, %133 : vector<1x128xf32>
    %cst_50 = arith.constant 0.000000e+00 : f32
    %135 = vector.broadcast %cst_50 : f32 to vector<1x128xf32>
    %136 = arith.maximumf %134, %135 : vector<1x128xf32>
    %c4_51 = arith.constant 4 : index
    %c0_52 = arith.constant 0 : index
    %137 = vector.load %arg2[%c4_51, %c0_52] : memref<13x128xf32, #tpu.memory_space<vmem>>, vector<1x128xf32>
    %c10 = arith.constant 10 : index
    %c0_53 = arith.constant 0 : index
    %138 = vector.load %arg2[%c10, %c0_53] : memref<13x128xf32, #tpu.memory_space<vmem>>, vector<1x128xf32>
    %cst_54 = arith.constant 9.99999974E-6 : f32
    %139 = vector.broadcast %cst_54 : f32 to vector<1x128xf32>
    %140 = arith.addf %136, %139 : vector<1x128xf32>
    %141 = math.rsqrt %140 : vector<1x128xf32>
    %142 = arith.mulf %137, %141 : vector<1x128xf32>
    %143 = arith.mulf %131, %142 : vector<1x128xf32>
    %144 = arith.subf %138, %143 : vector<1x128xf32>
    %145 = vector.broadcast %142 : vector<1x128xf32> to vector<8x128xf32>
    %146 = arith.mulf %124, %145 : vector<8x128xf32>
    %147 = vector.broadcast %144 : vector<1x128xf32> to vector<8x128xf32>
    %148 = arith.addf %146, %147 : vector<8x128xf32>
    %cst_55 = arith.constant 0.000000e+00 : f32
    %149 = vector.broadcast %cst_55 : f32 to vector<8x128xf32>
    %150 = arith.maximumf %148, %149 : vector<8x128xf32>
    %c5 = arith.constant 5 : index
    %c0_56 = arith.constant 0 : index
    %c0_57 = arith.constant 0 : index
    %151 = vector.load %arg1[%c5, %c0_56, %c0_57] : memref<7x128x128xbf16, #tpu.memory_space<vmem>>, vector<1x128x128xbf16>
    %152 = vector.shape_cast %151 : vector<1x128x128xbf16> to vector<128x128xbf16>
    %153 = arith.truncf %150 : vector<8x128xf32> to vector<8x128xbf16>
    %cst_58 = arith.constant dense<0.000000e+00> : vector<8x128xf32>
    %154 = tpu.matmul %153, %152, %cst_58 {dimension_numbers = #tpu.dot_dimension_numbers<[1], [0], [0], [1], [0, 0, 1, 1], [], []>} : vector<8x128xbf16>, vector<128x128xbf16>, vector<8x128xf32> -> vector<8x128xf32>
    %155 = arith.mulf %154, %154 : vector<8x128xf32>
    %156 = tpu.concatenate %154, %155 in 1 : vector<8x128xf32>, vector<8x128xf32> -> vector<8x256xf32>
    %cst_59 = arith.constant dense<0.000000e+00> : vector<256xf32>
    %157 = vector.multi_reduction <add>, %156, %cst_59 [0] : vector<8x256xf32> to vector<256xf32>
    %158 = vector.shape_cast %157 : vector<256xf32> to vector<1x256xf32>
    %cst_60 = arith.constant 8.000000e+00 : f32
    %159 = vector.broadcast %cst_60 : f32 to vector<1x256xf32>
    %160 = arith.divf %158, %159 : vector<1x256xf32>
    %161 = vector.extract_strided_slice %160 {offsets = [0, 0], sizes = [1, 128], strides = [1, 1]} : vector<1x256xf32> to vector<1x128xf32>
    %162 = vector.extract_strided_slice %160 {offsets = [0, 128], sizes = [1, 128], strides = [1, 1]} : vector<1x256xf32> to vector<1x128xf32>
    %163 = arith.mulf %161, %161 : vector<1x128xf32>
    %164 = arith.subf %162, %163 : vector<1x128xf32>
    %cst_61 = arith.constant 0.000000e+00 : f32
    %165 = vector.broadcast %cst_61 : f32 to vector<1x128xf32>
    %166 = arith.maximumf %164, %165 : vector<1x128xf32>
    %c5_62 = arith.constant 5 : index
    %c0_63 = arith.constant 0 : index
    %167 = vector.load %arg2[%c5_62, %c0_63] : memref<13x128xf32, #tpu.memory_space<vmem>>, vector<1x128xf32>
    %c11 = arith.constant 11 : index
    %c0_64 = arith.constant 0 : index
    %168 = vector.load %arg2[%c11, %c0_64] : memref<13x128xf32, #tpu.memory_space<vmem>>, vector<1x128xf32>
    %cst_65 = arith.constant 9.99999974E-6 : f32
    %169 = vector.broadcast %cst_65 : f32 to vector<1x128xf32>
    %170 = arith.addf %166, %169 : vector<1x128xf32>
    %171 = math.rsqrt %170 : vector<1x128xf32>
    %172 = arith.mulf %167, %171 : vector<1x128xf32>
    %173 = arith.mulf %161, %172 : vector<1x128xf32>
    %174 = arith.subf %168, %173 : vector<1x128xf32>
    %175 = vector.broadcast %172 : vector<1x128xf32> to vector<8x128xf32>
    %176 = arith.mulf %154, %175 : vector<8x128xf32>
    %177 = vector.broadcast %174 : vector<1x128xf32> to vector<8x128xf32>
    %178 = arith.addf %176, %177 : vector<8x128xf32>
    %cst_66 = arith.constant 0.000000e+00 : f32
    %179 = vector.broadcast %cst_66 : f32 to vector<8x128xf32>
    %180 = arith.maximumf %178, %179 : vector<8x128xf32>
    %c12 = arith.constant 12 : index
    %c0_67 = arith.constant 0 : index
    %181 = vector.load %arg2[%c12, %c0_67] : memref<13x128xf32, #tpu.memory_space<vmem>>, vector<1x128xf32>
    %182 = arith.truncf %180 : vector<8x128xf32> to vector<8x128xbf16>
    %c6_68 = arith.constant 6 : index
    %c0_69 = arith.constant 0 : index
    %c0_70 = arith.constant 0 : index
    %183 = vector.load %arg1[%c6_68, %c0_69, %c0_70] : memref<7x128x128xbf16, #tpu.memory_space<vmem>>, vector<1x128x128xbf16>
    %184 = vector.shape_cast %183 : vector<1x128x128xbf16> to vector<128x128xbf16>
    %cst_71 = arith.constant dense<0.000000e+00> : vector<8x128xf32>
    %185 = tpu.matmul %182, %184, %cst_71 {dimension_numbers = #tpu.dot_dimension_numbers<[1], [0], [0], [1], [0, 0, 1, 1], [], []>} : vector<8x128xbf16>, vector<128x128xbf16>, vector<8x128xf32> -> vector<8x128xf32>
    %186 = vector.broadcast %181 : vector<1x128xf32> to vector<8x128xf32>
    %187 = arith.addf %185, %186 : vector<8x128xf32>
    %c0_72 = arith.constant 0 : index
    %c0_73 = arith.constant 0 : index
    %188 = vector.load %arg3[%c0_72, %c0_73] : memref<8x128xf32, #tpu.memory_space<vmem>>, vector<8x128xf32>
    tpu.vector_store %arg3[%c0_72, %c0_73], %187 {strides = array<i32>} : memref<8x128xf32, #tpu.memory_space<vmem>>, vector<8x128xf32>,
    return
  }
}

</mosaic_0001>

<llo_original>
// kernel: mlp_forward.1
$region0: #{mlp_forward.1}
  #allocation0 [shape = 'u32[]', space=smem, size = 0x4, offset = 0x4, fixed_abs, tag = 'smem constant byte address 0x4 - core index']
  #allocation1 [shape = 'u32[72,128]{1,0:T(1,128)}', space=vmem, size = 0x9000, scoped, tag = 'internal scratch']
  %s0 = inlined_call_operand.vmem [shape: f32[8,128], index: 0, kind: input, shape index: {}]
  %s1 = inlined_call_operand.hbm [shape: bf16[7,128,128], index: 1, kind: input, shape index: {}]
  %s2 = inlined_call_operand.vmem [shape: f32[13,128], index: 2, kind: input, shape index: {}]
  %s3 = inlined_call_operand.hbm [shape: f32[8,128], index: 3, kind: output, shape index: {}]
  %s4 = sld [smem:[#allocation0]]
  $region26: #{mlp_forward.1} parent=0
    _
  %s6 = ssub.s32 1, %s4
  %s7 = scalar_select 0, %s6, %s4
  $region1: #{mlp_forward.1} parent=0
    #allocation2 [shape = 'u8[229376]{0}', space=vmem, size = 0x38000, scoped, tag = 'input window, operand 1, single buffered']
    #allocation3 [shape = 's32[1]{0}', space=sflag, size = 0x4, scoped, tag = 'scoped memory for mlp_forward.1']
    #allocation4 [shape = 's32[1]{0}', space=sflag, size = 0x4, scoped, tag = 'scoped memory for mlp_forward.1']
    #allocation5 [shape = 'u8[4096]{0}', space=vmem, size = 0x1000, scoped, tag = 'output window, operand 0, single buffered']
    %8 = vsyncpa [#allocation3], 0
    %9 = vsyncpa [#allocation4], 0
    // Predicated region
    $region2: #{mlp_forward.1} parent=1 // pred_check
      _
    $region3: #{mlp_forward.1} parent=1 // pred_check_branch
      %11 = sbr.rel (0) target = $region5
    $region4: #{mlp_forward.1} parent=1 // pred_region
      _
    $region5: #{mlp_forward.1} parent=1 // pred_fallthru
      _
    // Predicated region
    $region6: #{mlp_forward.1} parent=1 // pred_check
      _
    $region7: #{mlp_forward.1} parent=1 // pred_check_branch
      %13 = sbr.rel (0) target = $region9
    $region8: #{mlp_forward.1} parent=1 // pred_region
      %15 = vsyncadd [#allocation3], 0
      %s16 = sshll.u32 %s1, 4
      %s17 = int_to_ptr.hbm [resolvable:$true] %s16
      %s18 = sshll.u32 [#allocation2], 4
      %s19 = int_to_ptr.vmem [resolvable:$true] %s18
      %24 = dma.hbm_to_vmem [thread:$0]  %s17, 7168, %s19, [#allocation3], 64, 64, 4
    $region9: #{mlp_forward.1} parent=1 // pred_fallthru
      _
    // Predicated region
    $region10: #{mlp_forward.1} parent=1 // pred_check
      _
    $region11: #{mlp_forward.1} parent=1 // pred_check_branch
      %26 = sbr.rel (0) target = $region13
    $region12: #{mlp_forward.1} parent=1 // pred_region
      _
    $region13: #{mlp_forward.1} parent=1 // pred_fallthru
      _
    // Predicated region
    $region14: #{mlp_forward.1} parent=1 // pred_check
      _
    $region15: #{mlp_forward.1} parent=1 // pred_check_branch
      %28 = sbr.rel (0) target = $region17
    $region16: #{mlp_forward.1} parent=1 // pred_region
      %30 = dma.done [#allocation3], 7168
    $region17: #{mlp_forward.1} parent=1 // pred_fallthru
      _
    %v31 = vld [vmem:[%s0] sm:$0xff]
    %v32 = vld [vmem:[#allocation2] sm:$0xf]
    %v33 = vld [vmem:[#allocation2 + $0x4] sm:$0xf]
    %v34 = vld [vmem:[#allocation2 + $0x8] sm:$0xf]
    %v35 = vld [vmem:[#allocation2 + $0xc] sm:$0xf]
    %v36 = vld [vmem:[#allocation2 + $0x10] sm:$0xf]
    %v37 = vld [vmem:[#allocation2 + $0x14] sm:$0xf]
    %v38 = vld [vmem:[#allocation2 + $0x18] sm:$0xf]
    %v39 = vld [vmem:[#allocation2 + $0x1c] sm:$0xf]
    %v40 = vld [vmem:[#allocation2 + $0x20] sm:$0xf]
    %v41 = vld [vmem:[#allocation2 + $0x24] sm:$0xf]
    %v42 = vld [vmem:[#allocation2 + $0x28] sm:$0xf]
    %v43 = vld [vmem:[#allocation2 + $0x2c] sm:$0xf]
    %v44 = vld [vmem:[#allocation2 + $0x30] sm:$0xf]
    %v45 = vld [vmem:[#allocation2 + $0x34] sm:$0xf]
    %v46 = vld [vmem:[#allocation2 + $0x38] sm:$0xf]
    %v47 = vld [vmem:[#allocation2 + $0x3c] sm:$0xf]
    %v48 = vpack.c.bf16 %v31, %v31
    %v65 = vunpack.c.l.b16 %v32
    %v66 = vunpack.c.l.b16 %v33
    %v67 = vunpack.c.l.b16 %v34
    %v68 = vunpack.c.l.b16 %v35
    %v69 = vunpack.c.l.b16 %v36
    %v70 = vunpack.c.l.b16 %v37
    %v71 = vunpack.c.l.b16 %v38
    %v72 = vunpack.c.l.b16 %v39
    %v73 = vunpack.c.l.b16 %v40
    %v74 = vunpack.c.l.b16 %v41
    %v75 = vunpack.c.l.b16 %v42
    %v76 = vunpack.c.l.b16 %v43
    %v77 = vunpack.c.l.b16 %v44
    %v78 = vunpack.c.l.b16 %v45
    %v79 = vunpack.c.l.b16 %v46
    %v80 = vunpack.c.l.b16 %v47
    %v81 = vpack.c.b16 %v66, %v65
    %v82 = vpack.c.b16 %v68, %v67
    %v83 = vpack.c.b16 %v70, %v69
    %v84 = vpack.c.b16 %v72, %v71
    %v85 = vpack.c.b16 %v74, %v73
    %v86 = vpack.c.b16 %v76, %v75
    %v87 = vpack.c.b16 %v78, %v77
    %v88 = vpack.c.b16 %v80, %v79
    %97 = vmatpush.bf16.msra.mxu0 %v88
    %98 = vmatpush.bf16.msra.mxu0 %v87
    %99 = vmatpush.bf16.msra.mxu0 %v86
    %100 = vmatpush.bf16.msra.mxu0 %v85
    %101 = vmatpush.bf16.msra.mxu0 %v84
    %102 = vmatpush.bf16.msra.mxu0 %v83
    %103 = vmatpush.bf16.msra.mxu0 %v82
    %104 = vmatpush.bf16.msra.mxu0 %v81
    %105 = vmatmul.bf16.gmra.mxu0 %v48
    %v106 = vpop.f32.mrf.mxu0
    %v107 = vadd.f32 0.0, %v106
    %v108 = vpop.f32.mrf.mxu0
    %109 = vdwg.mxu0
    %v110 = vmul.f32 %v107, %v107
    %v111 = vrot.slane %v107, 4
    %v112 = vadd.f32 %v107, %v111
    %v113 = vrot.slane %v112, 2
    %v114 = vadd.f32 %v112, %v113
    %v115 = vrot.slane %v114, 1
    %v116 = vadd.f32 %v114, %v115
    %v117 = vrot.slane %v110, 4
    %v118 = vadd.f32 %v110, %v117
    %v119 = vrot.slane %v118, 2
    %v120 = vadd.f32 %v118, %v119
    %v121 = vrot.slane %v120, 1
    %v122 = vadd.f32 %v120, %v121
    %v123 = vrcp.pop 8.0
    %v124 = vmul.f32 8.0, %v123
    %v125 = vsub.f32 1.0, %v124
    %v126 = vmul.f32 %v123, %v125
    %v127 = vadd.f32 %v123, %v126
    %vm128 = vweird.f32 %v123
    %v129 = vsel %vm128, %v123, %v127
    %v130 = vmul.f32 %v116, %v129
    %v131 = vmul.f32 %v122, %v129
    %v132 = vmul.f32 %v130, %v130
    %v133 = vsub.f32 %v131, %v132
    %v134 = vmax.f32 %v133, 0.0
    %v135 = vld [vmem:[%s2] sm:$0x1]
    %v136 = vld [vmem:[%s2 + $0x6] sm:$0x1]
    %v137 = vadd.f32 %v134, 1e-05
    %v138 = vrsqrt.pop %v137
    %v139 = vmul.f32 %v138, %v137
    %v140 = vmul.f32 %v139, %v138
    %v141 = vmul.f32 0.5, %v140
    %v142 = vsub.f32 1.5, %v141
    %v143 = vmul.f32 %v138, %v142
    %vm144 = vweird.f32 %v137
    %vm145 = vweird.f32 %v138
    %vm146 = vmor %vm144, %vm145
    %v147 = vsel %vm146, %v138, %v143
    %v148 = vmul.f32 %v135, %v147
    %v149 = vmul.f32 %v130, %v148
    %v150 = vsub.f32 %v136, %v149
    %v151 = vperm.slane %v148, 0
    %v152 = vmul.f32 %v107, %v151
    %v153 = vperm.slane %v150, 0
    %v154 = vadd.f32 %v152, %v153
    %v155 = vmax.f32 %v154, 0.0
    %s156 = scalar_lea.vmem [#allocation2], 64
    %v157 = vld [vmem:[%s156] sm:$0xf]
    %v158 = vld [vmem:[%s156 + $0x4] sm:$0xf]
    %v159 = vld [vmem:[%s156 + $0x8] sm:$0xf]
    %v160 = vld [vmem:[%s156 + $0xc] sm:$0xf]
    %v161 = vld [vmem:[%s156 + $0x10] sm:$0xf]
    %v162 = vld [vmem:[%s156 + $0x14] sm:$0xf]
    %v163 = vld [vmem:[%s156 + $0x18] sm:$0xf]
    %v164 = vld [vmem:[%s156 + $0x1c] sm:$0xf]
    %v165 = vld [vmem:[%s156 + $0x20] sm:$0xf]
    %v166 = vld [vmem:[%s156 + $0x24] sm:$0xf]
    %v167 = vld [vmem:[%s156 + $0x28] sm:$0xf]
    %v168 = vld [vmem:[%s156 + $0x2c] sm:$0xf]
    %v169 = vld [vmem:[%s156 + $0x30] sm:$0xf]
    %v170 = vld [vmem:[%s156 + $0x34] sm:$0xf]
    %v171 = vld [vmem:[%s156 + $0x38] sm:$0xf]
    %v172 = vld [vmem:[%s156 + $0x3c] sm:$0xf]
    %v173 = vpack.c.bf16 %v155, %v155
    %v190 = vunpack.c.l.b16 %v157
    %v191 = vunpack.c.l.b16 %v158
    %v192 = vunpack.c.l.b16 %v159
    %v193 = vunpack.c.l.b16 %v160
    %v194 = vunpack.c.l.b16 %v161
    %v195 = vunpack.c.l.b16 %v162
    %v196 = vunpack.c.l.b16 %v163
    %v197 = vunpack.c.l.b16 %v164
    %v198 = vunpack.c.l.b16 %v165
    %v199 = vunpack.c.l.b16 %v166
    %v200 = vunpack.c.l.b16 %v167
    %v201 = vunpack.c.l.b16 %v168
    %v202 = vunpack.c.l.b16 %v169
    %v203 = vunpack.c.l.b16 %v170
    %v204 = vunpack.c.l.b16 %v171
    %v205 = vunpack.c.l.b16 %v172
    %v206 = vpack.c.b16 %v191, %v190
    %v207 = vpack.c.b16 %v193, %v192
    %v208 = vpack.c.b16 %v195, %v194
    %v209 = vpack.c.b16 %v197, %v196
    %v210 = vpack.c.b16 %v199, %v198
    %v211 = vpack.c.b16 %v201, %v200
    %v212 = vpack.c.b16 %v203, %v202
    %v213 = vpack.c.b16 %v205, %v204
    %222 = vmatpush.bf16.msra.mxu0 %v213
    %223 = vmatpush.bf16.msra.mxu0 %v212
    %224 = vmatpush.bf16.msra.mxu0 %v211
    %225 = vmatpush.bf16.msra.mxu0 %v210
    %226 = vmatpush.bf16.msra.mxu0 %v209
    %227 = vmatpush.bf16.msra.mxu0 %v208
    %228 = vmatpush.bf16.msra.mxu0 %v207
    %229 = vmatpush.bf16.msra.mxu0 %v206
    %230 = vmatmul.bf16.gmra.mxu0 %v173
    %v231 = vpop.f32.mrf.mxu0
    %v232 = vadd.f32 0.0, %v231
    %v233 = vpop.f32.mrf.mxu0
    %234 = vdwg.mxu0
    %v235 = vmul.f32 %v232, %v232
    %v236 = vrot.slane %v232, 4
    %v237 = vadd.f32 %v232, %v236
    %v238 = vrot.slane %v237, 2
    %v239 = vadd.f32 %v237, %v238
    %v240 = vrot.slane %v239, 1
    %v241 = vadd.f32 %v239, %v240
    %v242 = vrot.slane %v235, 4
    %v243 = vadd.f32 %v235, %v242
    %v244 = vrot.slane %v243, 2
    %v245 = vadd.f32 %v243, %v244
    %v246 = vrot.slane %v245, 1
    %v247 = vadd.f32 %v245, %v246
    %v248 = vmul.f32 %v241, %v129
    %v249 = vmul.f32 %v247, %v129
    %v250 = vmul.f32 %v248, %v248
    %v251 = vsub.f32 %v249, %v250
    %v252 = vmax.f32 %v251, 0.0
    %v253 = vld [vmem:[%s2 + $0x1] sm:$0x1]
    %v254 = vld [vmem:[%s2 + $0x7] sm:$0x1]
    %v255 = vadd.f32 %v252, 1e-05
    %v256 = vrsqrt.pop %v255
    %v257 = vmul.f32 %v256, %v255
    %v258 = vmul.f32 %v257, %v256
    %v259 = vmul.f32 0.5, %v258
    %v260 = vsub.f32 1.5, %v259
    %v261 = vmul.f32 %v256, %v260
    %vm262 = vweird.f32 %v255
    %vm263 = vweird.f32 %v256
    %vm264 = vmor %vm262, %vm263
    %v265 = vsel %vm264, %v256, %v261
    %v266 = vmul.f32 %v253, %v265
    %v267 = vmul.f32 %v248, %v266
    %v268 = vsub.f32 %v254, %v267
    %v269 = vperm.slane %v266, 0
    %v270 = vmul.f32 %v232, %v269
    %v271 = vperm.slane %v268, 0
    %v272 = vadd.f32 %v270, %v271
    %v273 = vmax.f32 %v272, 0.0
    %s274 = scalar_lea.vmem [#allocation2], 128
    %v275 = vld [vmem:[%s274] sm:$0xf]
    %v276 = vld [vmem:[%s274 + $0x4] sm:$0xf]
    %v277 = vld [vmem:[%s274 + $0x8] sm:$0xf]
    %v278 = vld [vmem:[%s274 + $0xc] sm:$0xf]
    %v279 = vld [vmem:[%s274 + $0x10] sm:$0xf]
    %v280 = vld [vmem:[%s274 + $0x14] sm:$0xf]
    %v281 = vld [vmem:[%s274 + $0x18] sm:$0xf]
    %v282 = vld [vmem:[%s274 + $0x1c] sm:$0xf]
    %v283 = vld [vmem:[%s274 + $0x20] sm:$0xf]
    %v284 = vld [vmem:[%s274 + $0x24] sm:$0xf]
    %v285 = vld [vmem:[%s274 + $0x28] sm:$0xf]
    %v286 = vld [vmem:[%s274 + $0x2c] sm:$0xf]
    %v287 = vld [vmem:[%s274 + $0x30] sm:$0xf]
    %v288 = vld [vmem:[%s274 + $0x34] sm:$0xf]
    %v289 = vld [vmem:[%s274 + $0x38] sm:$0xf]
    %v290 = vld [vmem:[%s274 + $0x3c] sm:$0xf]
    %v291 = vpack.c.bf16 %v273, %v273
    %v308 = vunpack.c.l.b16 %v275
    %v309 = vunpack.c.l.b16 %v276
    %v310 = vunpack.c.l.b16 %v277
    %v311 = vunpack.c.l.b16 %v278
    %v312 = vunpack.c.l.b16 %v279
    %v313 = vunpack.c.l.b16 %v280
    %v314 = vunpack.c.l.b16 %v281
    %v315 = vunpack.c.l.b16 %v282
    %v316 = vunpack.c.l.b16 %v283
    %v317 = vunpack.c.l.b16 %v284
    %v318 = vunpack.c.l.b16 %v285
    %v319 = vunpack.c.l.b16 %v286
    %v320 = vunpack.c.l.b16 %v287
    %v321 = vunpack.c.l.b16 %v288
    %v322 = vunpack.c.l.b16 %v289
    %v323 = vunpack.c.l.b16 %v290
    %v324 = vpack.c.b16 %v309, %v308
    %v325 = vpack.c.b16 %v311, %v310
    %v326 = vpack.c.b16 %v313, %v312
    %v327 = vpack.c.b16 %v315, %v314
    %v328 = vpack.c.b16 %v317, %v316
    %v329 = vpack.c.b16 %v319, %v318
    %v330 = vpack.c.b16 %v321, %v320
    %v331 = vpack.c.b16 %v323, %v322
    %340 = vmatpush.bf16.msra.mxu0 %v331
    %341 = vmatpush.bf16.msra.mxu0 %v330
    %342 = vmatpush.bf16.msra.mxu0 %v329
    %343 = vmatpush.bf16.msra.mxu0 %v328
    %344 = vmatpush.bf16.msra.mxu0 %v327
    %345 = vmatpush.bf16.msra.mxu0 %v326
    %346 = vmatpush.bf16.msra.mxu0 %v325
    %347 = vmatpush.bf16.msra.mxu0 %v324
    %348 = vmatmul.bf16.gmra.mxu0 %v291
    %v349 = vpop.f32.mrf.mxu0
    %v350 = vadd.f32 0.0, %v349
    %v351 = vpop.f32.mrf.mxu0
    %352 = vdwg.mxu0
    %v353 = vmul.f32 %v350, %v350
    %v354 = vrot.slane %v350, 4
    %v355 = vadd.f32 %v350, %v354
    %v356 = vrot.slane %v355, 2
    %v357 = vadd.f32 %v355, %v356
    %v358 = vrot.slane %v357, 1
    %v359 = vadd.f32 %v357, %v358
    %v360 = vrot.slane %v353, 4
    %v361 = vadd.f32 %v353, %v360
    %v362 = vrot.slane %v361, 2
    %v363 = vadd.f32 %v361, %v362
    %v364 = vrot.slane %v363, 1
    %v365 = vadd.f32 %v363, %v364
    %v366 = vmul.f32 %v359, %v129
    %v367 = vmul.f32 %v365, %v129
    %v368 = vmul.f32 %v366, %v366
    %v369 = vsub.f32 %v367, %v368
    %v370 = vmax.f32 %v369, 0.0
    %v371 = vld [vmem:[%s2 + $0x2] sm:$0x1]
    %v372 = vld [vmem:[%s2 + $0x8] sm:$0x1]
    %v373 = vadd.f32 %v370, 1e-05
    %v374 = vrsqrt.pop %v373
    %v375 = vmul.f32 %v374, %v373
    %v376 = vmul.f32 %v375, %v374
    %v377 = vmul.f32 0.5, %v376
    %v378 = vsub.f32 1.5, %v377
    %v379 = vmul.f32 %v374, %v378
    %vm380 = vweird.f32 %v373
    %vm381 = vweird.f32 %v374
    %vm382 = vmor %vm380, %vm381
    %v383 = vsel %vm382, %v374, %v379
    %v384 = vmul.f32 %v371, %v383
    %v385 = vmul.f32 %v366, %v384
    %v386 = vsub.f32 %v372, %v385
    %v387 = vperm.slane %v384, 0
    %v388 = vmul.f32 %v350, %v387
    %v389 = vperm.slane %v386, 0
    %v390 = vadd.f32 %v388, %v389
    %v391 = vmax.f32 %v390, 0.0
    %s392 = scalar_lea.vmem [#allocation2], 192
    %v393 = vld [vmem:[%s392] sm:$0xf]
    %v394 = vld [vmem:[%s392 + $0x4] sm:$0xf]
    %v395 = vld [vmem:[%s392 + $0x8] sm:$0xf]
    %v396 = vld [vmem:[%s392 + $0xc] sm:$0xf]
    %v397 = vld [vmem:[%s392 + $0x10] sm:$0xf]
    %v398 = vld [vmem:[%s392 + $0x14] sm:$0xf]
    %v399 = vld [vmem:[%s392 + $0x18] sm:$0xf]
    %v400 = vld [vmem:[%s392 + $0x1c] sm:$0xf]
    %v401 = vld [vmem:[%s392 + $0x20] sm:$0xf]
    %v402 = vld [vmem:[%s392 + $0x24] sm:$0xf]
    %v403 = vld [vmem:[%s392 + $0x28] sm:$0xf]
    %v404 = vld [vmem:[%s392 + $0x2c] sm:$0xf]
    %v405 = vld [vmem:[%s392 + $0x30] sm:$0xf]
    %v406 = vld [vmem:[%s392 + $0x34] sm:$0xf]
    %v407 = vld [vmem:[%s392 + $0x38] sm:$0xf]
    %v408 = vld [vmem:[%s392 + $0x3c] sm:$0xf]
    %v409 = vpack.c.bf16 %v391, %v391
    %v426 = vunpack.c.l.b16 %v393
    %v427 = vunpack.c.l.b16 %v394
    %v428 = vunpack.c.l.b16 %v395
    %v429 = vunpack.c.l.b16 %v396
    %v430 = vunpack.c.l.b16 %v397
    %v431 = vunpack.c.l.b16 %v398
    %v432 = vunpack.c.l.b16 %v399
    %v433 = vunpack.c.l.b16 %v400
    %v434 = vunpack.c.l.b16 %v401
    %v435 = vunpack.c.l.b16 %v402
    %v436 = vunpack.c.l.b16 %v403
    %v437 = vunpack.c.l.b16 %v404
    %v438 = vunpack.c.l.b16 %v405
    %v439 = vunpack.c.l.b16 %v406
    %v440 = vunpack.c.l.b16 %v407
    %v441 = vunpack.c.l.b16 %v408
    %v442 = vpack.c.b16 %v427, %v426
    %v443 = vpack.c.b16 %v429, %v428
    %v444 = vpack.c.b16 %v431, %v430
    %v445 = vpack.c.b16 %v433, %v432
    %v446 = vpack.c.b16 %v435, %v434
    %v447 = vpack.c.b16 %v437, %v436
    %v448 = vpack.c.b16 %v439, %v438
    %v449 = vpack.c.b16 %v441, %v440
    %458 = vmatpush.bf16.msra.mxu0 %v449
    %459 = vmatpush.bf16.msra.mxu0 %v448
    %460 = vmatpush.bf16.msra.mxu0 %v447
    %461 = vmatpush.bf16.msra.mxu0 %v446
    %462 = vmatpush.bf16.msra.mxu0 %v445
    %463 = vmatpush.bf16.msra.mxu0 %v444
    %464 = vmatpush.bf16.msra.mxu0 %v443
    %465 = vmatpush.bf16.msra.mxu0 %v442
    %466 = vmatmul.bf16.gmra.mxu0 %v409
    %v467 = vpop.f32.mrf.mxu0
    %v468 = vadd.f32 0.0, %v467
    %v469 = vpop.f32.mrf.mxu0
    %470 = vdwg.mxu0
    %v471 = vmul.f32 %v468, %v468
    %v472 = vrot.slane %v468, 4
    %v473 = vadd.f32 %v468, %v472
    %v474 = vrot.slane %v473, 2
    %v475 = vadd.f32 %v473, %v474
    %v476 = vrot.slane %v475, 1
    %v477 = vadd.f32 %v475, %v476
    %v478 = vrot.slane %v471, 4
    %v479 = vadd.f32 %v471, %v478
    %v480 = vrot.slane %v479, 2
    %v481 = vadd.f32 %v479, %v480
    %v482 = vrot.slane %v481, 1
    %v483 = vadd.f32 %v481, %v482
    %v484 = vmul.f32 %v477, %v129
    %v485 = vmul.f32 %v483, %v129
    %v486 = vmul.f32 %v484, %v484
    %v487 = vsub.f32 %v485, %v486
    %v488 = vmax.f32 %v487, 0.0
    %v489 = vld [vmem:[%s2 + $0x3] sm:$0x1]
    %v490 = vld [vmem:[%s2 + $0x9] sm:$0x1]
    %v491 = vadd.f32 %v488, 1e-05
    %v492 = vrsqrt.pop %v491
    %v493 = vmul.f32 %v492, %v491
    %v494 = vmul.f32 %v493, %v492
    %v495 = vmul.f32 0.5, %v494
    %v496 = vsub.f32 1.5, %v495
    %v497 = vmul.f32 %v492, %v496
    %vm498 = vweird.f32 %v491
    %vm499 = vweird.f32 %v492
    %vm500 = vmor %vm498, %vm499
    %v501 = vsel %vm500, %v492, %v497
    %v502 = vmul.f32 %v489, %v501
    %v503 = vmul.f32 %v484, %v502
    %v504 = vsub.f32 %v490, %v503
    %v505 = vperm.slane %v502, 0
    %v506 = vmul.f32 %v468, %v505
    %v507 = vperm.slane %v504, 0
    %v508 = vadd.f32 %v506, %v507
    %v509 = vmax.f32 %v508, 0.0
    %s510 = scalar_lea.vmem [#allocation2], 256
    %v511 = vld [vmem:[%s510] sm:$0xf]
    %v512 = vld [vmem:[%s510 + $0x4] sm:$0xf]
    %v513 = vld [vmem:[%s510 + $0x8] sm:$0xf]
    %v514 = vld [vmem:[%s510 + $0xc] sm:$0xf]
    %v515 = vld [vmem:[%s510 + $0x10] sm:$0xf]
    %v516 = vld [vmem:[%s510 + $0x14] sm:$0xf]
    %v517 = vld [vmem:[%s510 + $0x18] sm:$0xf]
    %v518 = vld [vmem:[%s510 + $0x1c] sm:$0xf]
    %v519 = vld [vmem:[%s510 + $0x20] sm:$0xf]
    %v520 = vld [vmem:[%s510 + $0x24] sm:$0xf]
    %v521 = vld [vmem:[%s510 + $0x28] sm:$0xf]
    %v522 = vld [vmem:[%s510 + $0x2c] sm:$0xf]
    %v523 = vld [vmem:[%s510 + $0x30] sm:$0xf]
    %v524 = vld [vmem:[%s510 + $0x34] sm:$0xf]
    %v525 = vld [vmem:[%s510 + $0x38] sm:$0xf]
    %v526 = vld [vmem:[%s510 + $0x3c] sm:$0xf]
    %v527 = vpack.c.bf16 %v509, %v509
    %v544 = vunpack.c.l.b16 %v511
    %v545 = vunpack.c.l.b16 %v512
    %v546 = vunpack.c.l.b16 %v513
    %v547 = vunpack.c.l.b16 %v514
    %v548 = vunpack.c.l.b16 %v515
    %v549 = vunpack.c.l.b16 %v516
    %v550 = vunpack.c.l.b16 %v517
    %v551 = vunpack.c.l.b16 %v518
    %v552 = vunpack.c.l.b16 %v519
    %v553 = vunpack.c.l.b16 %v520
    %v554 = vunpack.c.l.b16 %v521
    %v555 = vunpack.c.l.b16 %v522
    %v556 = vunpack.c.l.b16 %v523
    %v557 = vunpack.c.l.b16 %v524
    %v558 = vunpack.c.l.b16 %v525
    %v559 = vunpack.c.l.b16 %v526
    %v560 = vpack.c.b16 %v545, %v544
    %v561 = vpack.c.b16 %v547, %v546
    %v562 = vpack.c.b16 %v549, %v548
    %v563 = vpack.c.b16 %v551, %v550
    %v564 = vpack.c.b16 %v553, %v552
    %v565 = vpack.c.b16 %v555, %v554
    %v566 = vpack.c.b16 %v557, %v556
    %v567 = vpack.c.b16 %v559, %v558
    %576 = vmatpush.bf16.msra.mxu0 %v567
    %577 = vmatpush.bf16.msra.mxu0 %v566
    %578 = vmatpush.bf16.msra.mxu0 %v565
    %579 = vmatpush.bf16.msra.mxu0 %v564
    %580 = vmatpush.bf16.msra.mxu0 %v563
    %581 = vmatpush.bf16.msra.mxu0 %v562
    %582 = vmatpush.bf16.msra.mxu0 %v561
    %583 = vmatpush.bf16.msra.mxu0 %v560
    %584 = vmatmul.bf16.gmra.mxu0 %v527
    %v585 = vpop.f32.mrf.mxu0
    %v586 = vadd.f32 0.0, %v585
    %v587 = vpop.f32.mrf.mxu0
    %588 = vdwg.mxu0
    %v589 = vmul.f32 %v586, %v586
    %v590 = vrot.slane %v586, 4
    %v591 = vadd.f32 %v586, %v590
    %v592 = vrot.slane %v591, 2
    %v593 = vadd.f32 %v591, %v592
    %v594 = vrot.slane %v593, 1
    %v595 = vadd.f32 %v593, %v594
    %v596 = vrot.slane %v589, 4
    %v597 = vadd.f32 %v589, %v596
    %v598 = vrot.slane %v597, 2
    %v599 = vadd.f32 %v597, %v598
    %v600 = vrot.slane %v599, 1
    %v601 = vadd.f32 %v599, %v600
    %v602 = vmul.f32 %v595, %v129
    %v603 = vmul.f32 %v601, %v129
    %v604 = vmul.f32 %v602, %v602
    %v605 = vsub.f32 %v603, %v604
    %v606 = vmax.f32 %v605, 0.0
    %v607 = vld [vmem:[%s2 + $0x4] sm:$0x1]
    %v608 = vld [vmem:[%s2 + $0xa] sm:$0x1]
    %v609 = vadd.f32 %v606, 1e-05
    %v610 = vrsqrt.pop %v609
    %v611 = vmul.f32 %v610, %v609
    %v612 = vmul.f32 %v611, %v610
    %v613 = vmul.f32 0.5, %v612
    %v614 = vsub.f32 1.5, %v613
    %v615 = vmul.f32 %v610, %v614
    %vm616 = vweird.f32 %v609
    %vm617 = vweird.f32 %v610
    %vm618 = vmor %vm616, %vm617
    %v619 = vsel %vm618, %v610, %v615
    %v620 = vmul.f32 %v607, %v619
    %v621 = vmul.f32 %v602, %v620
    %v622 = vsub.f32 %v608, %v621
    %v623 = vperm.slane %v620, 0
    %v624 = vmul.f32 %v586, %v623
    %v625 = vperm.slane %v622, 0
    %v626 = vadd.f32 %v624, %v625
    %v627 = vmax.f32 %v626, 0.0
    %s628 = scalar_lea.vmem [#allocation2], 320
    %v629 = vld [vmem:[%s628] sm:$0xf]
    %v630 = vld [vmem:[%s628 + $0x4] sm:$0xf]
    %v631 = vld [vmem:[%s628 + $0x8] sm:$0xf]
    %v632 = vld [vmem:[%s628 + $0xc] sm:$0xf]
    %v633 = vld [vmem:[%s628 + $0x10] sm:$0xf]
    %v634 = vld [vmem:[%s628 + $0x14] sm:$0xf]
    %v635 = vld [vmem:[%s628 + $0x18] sm:$0xf]
    %v636 = vld [vmem:[%s628 + $0x1c] sm:$0xf]
    %v637 = vld [vmem:[%s628 + $0x20] sm:$0xf]
    %v638 = vld [vmem:[%s628 + $0x24] sm:$0xf]
    %v639 = vld [vmem:[%s628 + $0x28] sm:$0xf]
    %v640 = vld [vmem:[%s628 + $0x2c] sm:$0xf]
    %v641 = vld [vmem:[%s628 + $0x30] sm:$0xf]
    %v642 = vld [vmem:[%s628 + $0x34] sm:$0xf]
    %v643 = vld [vmem:[%s628 + $0x38] sm:$0xf]
    %v644 = vld [vmem:[%s628 + $0x3c] sm:$0xf]
    %v645 = vpack.c.bf16 %v627, %v627
    %v662 = vunpack.c.l.b16 %v629
    %v663 = vunpack.c.l.b16 %v630
    %v664 = vunpack.c.l.b16 %v631
    %v665 = vunpack.c.l.b16 %v632
    %v666 = vunpack.c.l.b16 %v633
    %v667 = vunpack.c.l.b16 %v634
    %v668 = vunpack.c.l.b16 %v635
    %v669 = vunpack.c.l.b16 %v636
    %v670 = vunpack.c.l.b16 %v637
    %v671 = vunpack.c.l.b16 %v638
    %v672 = vunpack.c.l.b16 %v639
    %v673 = vunpack.c.l.b16 %v640
    %v674 = vunpack.c.l.b16 %v641
    %v675 = vunpack.c.l.b16 %v642
    %v676 = vunpack.c.l.b16 %v643
    %v677 = vunpack.c.l.b16 %v644
    %v678 = vpack.c.b16 %v663, %v662
    %v679 = vpack.c.b16 %v665, %v664
    %v680 = vpack.c.b16 %v667, %v666
    %v681 = vpack.c.b16 %v669, %v668
    %v682 = vpack.c.b16 %v671, %v670
    %v683 = vpack.c.b16 %v673, %v672
    %v684 = vpack.c.b16 %v675, %v674
    %v685 = vpack.c.b16 %v677, %v676
    %694 = vmatpush.bf16.msra.mxu0 %v685
    %695 = vmatpush.bf16.msra.mxu0 %v684
    %696 = vmatpush.bf16.msra.mxu0 %v683
    %697 = vmatpush.bf16.msra.mxu0 %v682
    %698 = vmatpush.bf16.msra.mxu0 %v681
    %699 = vmatpush.bf16.msra.mxu0 %v680
    %700 = vmatpush.bf16.msra.mxu0 %v679
    %701 = vmatpush.bf16.msra.mxu0 %v678
    %702 = vmatmul.bf16.gmra.mxu0 %v645
    %v703 = vpop.f32.mrf.mxu0
    %v704 = vadd.f32 0.0, %v703
    %v705 = vpop.f32.mrf.mxu0
    %706 = vdwg.mxu0
    %v707 = vmul.f32 %v704, %v704
    %v708 = vrot.slane %v704, 4
    %v709 = vadd.f32 %v704, %v708
    %v710 = vrot.slane %v709, 2
    %v711 = vadd.f32 %v709, %v710
    %v712 = vrot.slane %v711, 1
    %v713 = vadd.f32 %v711, %v712
    %v714 = vrot.slane %v707, 4
    %v715 = vadd.f32 %v707, %v714
    %v716 = vrot.slane %v715, 2
    %v717 = vadd.f32 %v715, %v716
    %v718 = vrot.slane %v717, 1
    %v719 = vadd.f32 %v717, %v718
    %v720 = vmul.f32 %v713, %v129
    %v721 = vmul.f32 %v719, %v129
    %v722 = vmul.f32 %v720, %v720
    %v723 = vsub.f32 %v721, %v722
    %v724 = vmax.f32 %v723, 0.0
    %v725 = vld [vmem:[%s2 + $0x5] sm:$0x1]
    %v726 = vld [vmem:[%s2 + $0xb] sm:$0x1]
    %v727 = vadd.f32 %v724, 1e-05
    %v728 = vrsqrt.pop %v727
    %v729 = vmul.f32 %v728, %v727
    %v730 = vmul.f32 %v729, %v728
    %v731 = vmul.f32 0.5, %v730
    %v732 = vsub.f32 1.5, %v731
    %v733 = vmul.f32 %v728, %v732
    %vm734 = vweird.f32 %v727
    %vm735 = vweird.f32 %v728
    %vm736 = vmor %vm734, %vm735
    %v737 = vsel %vm736, %v728, %v733
    %v738 = vmul.f32 %v725, %v737
    %v739 = vmul.f32 %v720, %v738
    %v740 = vsub.f32 %v726, %v739
    %v741 = vperm.slane %v738, 0
    %v742 = vmul.f32 %v704, %v741
    %v743 = vperm.slane %v740, 0
    %v744 = vadd.f32 %v742, %v743
    %v745 = vmax.f32 %v744, 0.0
    %v746 = vld [vmem:[%s2 + $0xc] sm:$0x1]
    %v747 = vpack.c.bf16 %v745, %v745
    %s748 = scalar_lea.vmem [#allocation2], 384
    %v749 = vld [vmem:[%s748] sm:$0xf]
    %v750 = vld [vmem:[%s748 + $0x4] sm:$0xf]
    %v751 = vld [vmem:[%s748 + $0x8] sm:$0xf]
    %v752 = vld [vmem:[%s748 + $0xc] sm:$0xf]
    %v753 = vld [vmem:[%s748 + $0x10] sm:$0xf]
    %v754 = vld [vmem:[%s748 + $0x14] sm:$0xf]
    %v755 = vld [vmem:[%s748 + $0x18] sm:$0xf]
    %v756 = vld [vmem:[%s748 + $0x1c] sm:$0xf]
    %v757 = vld [vmem:[%s748 + $0x20] sm:$0xf]
    %v758 = vld [vmem:[%s748 + $0x24] sm:$0xf]
    %v759 = vld [vmem:[%s748 + $0x28] sm:$0xf]
    %v760 = vld [vmem:[%s748 + $0x2c] sm:$0xf]
    %v761 = vld [vmem:[%s748 + $0x30] sm:$0xf]
    %v762 = vld [vmem:[%s748 + $0x34] sm:$0xf]
    %v763 = vld [vmem:[%s748 + $0x38] sm:$0xf]
    %v764 = vld [vmem:[%s748 + $0x3c] sm:$0xf]
    %v765 = vperm.slane %v746, 0
    %v782 = vunpack.c.l.b16 %v749
    %v783 = vunpack.c.l.b16 %v750
    %v784 = vunpack.c.l.b16 %v751
    %v785 = vunpack.c.l.b16 %v752
    %v786 = vunpack.c.l.b16 %v753
    %v787 = vunpack.c.l.b16 %v754
    %v788 = vunpack.c.l.b16 %v755
    %v789 = vunpack.c.l.b16 %v756
    %v790 = vunpack.c.l.b16 %v757
    %v791 = vunpack.c.l.b16 %v758
    %v792 = vunpack.c.l.b16 %v759
    %v793 = vunpack.c.l.b16 %v760
    %v794 = vunpack.c.l.b16 %v761
    %v795 = vunpack.c.l.b16 %v762
    %v796 = vunpack.c.l.b16 %v763
    %v797 = vunpack.c.l.b16 %v764
    %v798 = vpack.c.b16 %v783, %v782
    %v799 = vpack.c.b16 %v785, %v784
    %v800 = vpack.c.b16 %v787, %v786
    %v801 = vpack.c.b16 %v789, %v788
    %v802 = vpack.c.b16 %v791, %v790
    %v803 = vpack.c.b16 %v793, %v792
    %v804 = vpack.c.b16 %v795, %v794
    %v805 = vpack.c.b16 %v797, %v796
    %814 = vmatpush.bf16.msra.mxu0 %v805
    %815 = vmatpush.bf16.msra.mxu0 %v804
    %816 = vmatpush.bf16.msra.mxu0 %v803
    %817 = vmatpush.bf16.msra.mxu0 %v802
    %818 = vmatpush.bf16.msra.mxu0 %v801
    %819 = vmatpush.bf16.msra.mxu0 %v800
    %820 = vmatpush.bf16.msra.mxu0 %v799
    %821 = vmatpush.bf16.msra.mxu0 %v798
    %822 = vmatmul.bf16.gmra.mxu0 %v747
    %v823 = vpop.f32.mrf.mxu0
    %v824 = vadd.f32 %v765, %v823
    %v825 = vpop.f32.mrf.mxu0
    %826 = vdwg.mxu0
    %827 = vst [vmem:[#allocation5] sm:$0xff] %v824
    // Predicated region
    $region18: #{mlp_forward.1} parent=1 // pred_check
      _
    $region19: #{mlp_forward.1} parent=1 // pred_check_branch
      %829 = sbr.rel (0) target = $region21
    $region20: #{mlp_forward.1} parent=1 // pred_region
      %831 = vsyncadd [#allocation4], 0
      %s833 = sshll.u32 [#allocation5], 4
      %s834 = int_to_ptr.vmem [resolvable:$true] %s833
      %s835 = sshll.u32 %s3, 4
      %s836 = int_to_ptr.hbm [resolvable:$true] %s835
      %838 = dma.vmem_to_hbm [thread:$0]  %s834, 128, %s836, [#allocation4]
    $region21: #{mlp_forward.1} parent=1 // pred_fallthru
      _
    // Predicated region
    $region22: #{mlp_forward.1} parent=1 // pred_check
      _
    $region23: #{mlp_forward.1} parent=1 // pred_check_branch
      %840 = sbr.rel (0) target = $region25
    $region24: #{mlp_forward.1} parent=1 // pred_region
      %842 = dma.done [#allocation4], 128
    $region25: #{mlp_forward.1} parent=1 // pred_fallthru
      _
    %843 = vsyncpa [#allocation3], 1
    %844 = vsyncpa [#allocation4], 1

</llo_original>
